<compile_context>
chip_gen: v6e
topology: v6e:2x2x1
jax: 0.10.0
libtpu: 0.0.40
codegen_flags: <defaults>
</compile_context>

<pallas_src>
import functools

import jax
import jax.numpy as jnp
from jax import lax
from jax.experimental import pallas as pl
from jax.experimental.pallas import tpu as pltpu

LANES = 128
TARGET_BLOCK_BYTES = 4 * 1024 * 1024   # per-input, per-grid-step DMA size
MAX_BLOCK_BYTES = 8 * 1024 * 1024      # stay well inside v7x's 64 MiB VMEM


def _cdiv(a, b):
    return -(-a // b)


def _round_up(a, b):
    return _cdiv(a, b) * b


def _tensorcores_per_chip():
    """2 on v7x-class chips (two TensorCores per JAX device), else 1."""
    try:
        kind = jax.devices()[0].device_kind.lower()
    except Exception:
        return 1
    return 2 if "v7" in kind else 1


def _ssq_kernel(p_ref, g_ref, o_ref, *, block_rows, blocks_per_shard,
                num_blocks, rows, has_row_tail, has_dup):
    """Per-shard partial sum of squared differences, accumulated in VMEM."""
    c = pl.program_id(0)        # shard axis (TensorCore on v7x)
    i = pl.program_id(1)        # block-within-shard (reduction axis)
    blk = c * blocks_per_shard + i

    @pl.when(i == 0)
    def _():
        o_ref[...] = jnp.zeros_like(o_ref)

    d = p_ref[...].astype(jnp.float32) - g_ref[...].astype(jnp.float32)

    def accumulate(dd):
        # Reduce the (block_rows, LANES) block along rows only; cross-lane
        # reduce + sqrt happen once in the wrapper.
        o_ref[...] += jnp.sum(dd * dd, axis=0, keepdims=True).reshape(1, 1, LANES)

    if has_row_tail:
        # Steady-state blocks: no mask (gated to the tail block only).
        @pl.when(blk < num_blocks - 1)
        def _():
            accumulate(d)

        # Tail block: rows >= `rows` were never DMA'd and hold stale VMEM.
        # Mask BEFORE squaring so stale NaN/Inf cannot reach the accumulator.
        @pl.when(blk == num_blocks - 1)
        def _():
            row_ids = blk * block_rows + lax.broadcasted_iota(jnp.int32, d.shape, 0)
            accumulate(jnp.where(row_ids < rows, d, 0.0))
    elif has_dup:
        # Uneven 2-core split: skip compute for the clamped duplicate block.
        @pl.when(blk < num_blocks)
        def _():
            accumulate(d)
    else:
        accumulate(d)


def cd_loss(prediction, ground_truth, *, block_rows=None):
    """sqrt(sum((prediction - ground_truth)^2)), matching CDLoss.forward."""
    assert prediction.shape == ground_truth.shape

    p = prediction.reshape(-1)
    g = ground_truth.reshape(-1)
    n = p.shape[0]
    if n == 0:
        return jnp.zeros((), jnp.float32)
    itemsize = jnp.dtype(prediction.dtype).itemsize

    # --- ragged tail (< 128 elements): tiny jnp reduction in the wrapper ----
    n_main = (n // LANES) * LANES
    tail_ssq = jnp.zeros((), jnp.float32)
    if n_main < n:
        dt = p[n_main:].astype(jnp.float32) - g[n_main:].astype(jnp.float32)
        tail_ssq = jnp.sum(dt * dt)
    if n_main == 0:
        return jnp.sqrt(tail_ssq)

    rows = n_main // LANES
    if n_main == n:
        p2 = p.reshape(rows, LANES)            # free bitcast (aligned case)
        g2 = g.reshape(rows, LANES)
    else:
        # Ragged case: XLA may materialize this prefix slice, but unlike the
        # old zero-pad path no padded copies are written and the kernel stays
        # mask-free in steady state.
        p2 = p[:n_main].reshape(rows, LANES)
        g2 = g[:n_main].reshape(rows, LANES)

    # --- block sizing: ~4 MiB per input per step, capped for v7x VMEM -------
    sub = {4: 8, 2: 16, 1: 32}.get(itemsize, 8)        # sublane multiple
    if block_rows is None:
        target_rows = max(sub, TARGET_BLOCK_BYTES // (LANES * itemsize))
    else:
        target_rows = block_rows
    max_rows = max(sub, MAX_BLOCK_BYTES // (LANES * itemsize))
    br = _round_up(min(target_rows, rows, max_rows), sub)
    num_blocks = _cdiv(rows, br)

    # --- shard across TensorCores on v7x; single shard on v5e/v6e -----------
    shards = max(1, min(_tensorcores_per_chip(), num_blocks))

    # Prefer an even block split so no clamped duplicate block is DMA'd.
    if shards > 1 and num_blocks % shards:
        nb_even = _round_up(num_blocks, shards)
        br_try = _round_up(_cdiv(rows, nb_even), sub)
        if br_try > 0 and _cdiv(rows, br_try) == nb_even:
            br, num_blocks = br_try, nb_even

    bpp = _cdiv(num_blocks, shards)
    has_dup = bpp * shards != num_blocks
    has_row_tail = (rows % br) != 0

    if has_dup:
        def in_map(c, i):
            # Clamp so no fully out-of-bounds DMA is issued; the duplicate
            # block's compute is skipped in-kernel.
            return (jnp.minimum(c * bpp + i, num_blocks - 1), 0)
    else:
        def in_map(c, i):
            return (c * bpp + i, 0)

    block_bytes = br * LANES * itemsize
    # 2 inputs x 2 pipeline buffers + output/acc + internal scratch headroom.
    vmem_limit = int(min(64 * 1024 * 1024, 4 * block_bytes + (8 << 20)))

    kernel = functools.partial(
        _ssq_kernel,
        block_rows=br,
        blocks_per_shard=bpp,
        num_blocks=num_blocks,
        rows=rows,
        has_row_tail=has_row_tail,
        has_dup=has_dup,
    )

    partials = pl.pallas_call(
        kernel,
        out_shape=jax.ShapeDtypeStruct((shards, 1, LANES), jnp.float32),
        grid_spec=pltpu.PrefetchScalarGridSpec(
            num_scalar_prefetch=0,
            grid=(shards, bpp),
            in_specs=[
                pl.BlockSpec((br, LANES), in_map),
                pl.BlockSpec((br, LANES), in_map),
            ],
            out_specs=pl.BlockSpec((1, 1, LANES), lambda c, i: (c, 0, 0)),
        ),
        compiler_params=pltpu.CompilerParams(
            dimension_semantics=(
                pltpu.CORE_PARALLEL if shards > 1 else pltpu.ARBITRARY,
                pltpu.ARBITRARY,
            ),
            vmem_limit_bytes=vmem_limit,
        ),
        cost_estimate=pl.CostEstimate(
            flops=3 * n,
            transcendentals=0,
            bytes_accessed=2 * n_main * itemsize + shards * LANES * 4,
        ),
    )(p2, g2)

    # Scalar finalize (glue): cross-lane reduce of the shard partials + sqrt.
    return jnp.sqrt(jnp.sum(partials) + tail_ssq)


if __name__ == "__main__":
    key = jax.random.PRNGKey(0)

    def _check(shape, dtype=jnp.float32, **kwargs):
        k1, k2 = jax.random.split(jax.random.fold_in(key, hash(shape) & 0xFFFF))
        pred = jax.random.normal(k1, shape, dtype=dtype)
        gt = jax.random.normal(k2, shape, dtype=dtype)
        loss = jax.block_until_ready(cd_loss(pred, gt, **kwargs))
        ref = jnp.sqrt(jnp.sum((pred.astype(jnp.float32)
                                - gt.astype(jnp.float32)) ** 2))
        assert jnp.allclose(loss, ref, rtol=1e-5, atol=1e-5), (shape, loss, ref)

    # Main NCHW-like case: batch=2, channels=4, spatial=16x16 (2048 elems,
    # lane-aligned -> fully zero-copy path).
    _check((2, 4, 16, 16))
    # Ragged numel (210): kernel streams the aligned prefix, wrapper sums the
    # <128-element tail; tail-block row mask path exercised.
    _check((2, 3, 5, 7))
    # Multi-block reduction path (forced small block size).
    _check((2, 4, 32, 32), block_rows=16)

    print("KERNEL_OK")
</pallas_src>

<mosaic_0001>
module attributes {stable_mosaic.version = 11 : i64} {
  func.func @_ssq_kernel(%arg0: i32, %arg1: i32, %arg2: memref<16x128xf32, #tpu.memory_space<vmem>>, %arg3: memref<16x128xf32, #tpu.memory_space<vmem>>, %arg4: memref<1x1x128xf32, #tpu.memory_space<vmem>>) attributes {dimension_semantics = [#tpu.dimension_semantics<arbitrary>, #tpu.dimension_semantics<arbitrary>], iteration_bounds = array<i64: 1, 1>, scalar_prefetch = 0 : i64, scratch_operands = 0 : i64, tpu.core_type = #tpu.core_type<tc>, window_params = [{transform_indices = @transform_0, window_bounds = array<i64: 16, 128>}, {transform_indices = @transform_1, window_bounds = array<i64: 16, 128>}, {transform_indices = @transform_2, window_bounds = array<i64: 1, 1, 128>}]} {
    %c0_i32 = arith.constant 0 : i32
    %0 = arith.cmpi eq, %arg1, %c0_i32 : i32
    %1 = arith.extui %0 : i1 to i32
    %c0_i32_0 = arith.constant 0 : i32
    %2 = arith.cmpi ne, %1, %c0_i32_0 : i32
    scf.if %2 {
      %cst_10 = arith.constant 0.000000e+00 : f32
      %13 = vector.broadcast %cst_10 : f32 to vector<1x1x128xf32>
      %c0_11 = arith.constant 0 : index
      %c0_12 = arith.constant 0 : index
      %c0_13 = arith.constant 0 : index
      %14 = vector.load %arg4[%c0_11, %c0_12, %c0_13] : memref<1x1x128xf32, #tpu.memory_space<vmem>>, vector<1x1x128xf32>
      tpu.vector_store %arg4[%c0_11, %c0_12, %c0_13], %13 {strides = array<i32>} : memref<1x1x128xf32, #tpu.memory_space<vmem>>, vector<1x1x128xf32>,
    } else {
    }
    %c0 = arith.constant 0 : index
    %c0_1 = arith.constant 0 : index
    %3 = vector.load %arg2[%c0, %c0_1] : memref<16x128xf32, #tpu.memory_space<vmem>>, vector<16x128xf32>
    %c0_2 = arith.constant 0 : index
    %c0_3 = arith.constant 0 : index
    %4 = vector.load %arg3[%c0_2, %c0_3] : memref<16x128xf32, #tpu.memory_space<vmem>>, vector<16x128xf32>
    %5 = arith.subf %3, %4 : vector<16x128xf32>
    %c0_4 = arith.constant 0 : index
    %c0_5 = arith.constant 0 : index
    %c0_6 = arith.constant 0 : index
    %6 = vector.load %arg4[%c0_4, %c0_5, %c0_6] : memref<1x1x128xf32, #tpu.memory_space<vmem>>, vector<1x1x128xf32>
    %7 = arith.mulf %5, %5 : vector<16x128xf32>
    %cst = arith.constant dense<0.000000e+00> : vector<128xf32>
    %8 = vector.multi_reduction <add>, %7, %cst [0] : vector<16x128xf32> to vector<128xf32>
    %9 = vector.shape_cast %8 : vector<128xf32> to vector<1x128xf32>
    %10 = vector.shape_cast %9 : vector<1x128xf32> to vector<1x1x128xf32>
    %11 = arith.addf %6, %10 : vector<1x1x128xf32>
    %c0_7 = arith.constant 0 : index
    %c0_8 = arith.constant 0 : index
    %c0_9 = arith.constant 0 : index
    %12 = vector.load %arg4[%c0_7, %c0_8, %c0_9] : memref<1x1x128xf32, #tpu.memory_space<vmem>>, vector<1x1x128xf32>
    tpu.vector_store %arg4[%c0_7, %c0_8, %c0_9], %11 {strides = array<i32>} : memref<1x1x128xf32, #tpu.memory_space<vmem>>, vector<1x1x128xf32>,
    return
  }
  func.func @transform_0(%arg0: i32, %arg1: i32) -> (i32, i32) {
    %c1_i32 = arith.constant 1 : i32
    %0 = arith.muli %arg0, %c1_i32 : i32
    %1 = arith.addi %0, %arg1 : i32
    %c0_i32 = arith.constant 0 : i32
    %c0_i32_0 = arith.constant 0 : i32
    return %1, %c0_i32 : i32, i32
  }
  func.func @transform_1(%arg0: i32, %arg1: i32) -> (i32, i32) {
    %c1_i32 = arith.constant 1 : i32
    %0 = arith.muli %arg0, %c1_i32 : i32
    %1 = arith.addi %0, %arg1 : i32
    %c0_i32 = arith.constant 0 : i32
    %c0_i32_0 = arith.constant 0 : i32
    return %1, %c0_i32 : i32, i32
  }
  func.func @transform_2(%arg0: i32, %arg1: i32) -> (i32, i32, i32) {
    %c0_i32 = arith.constant 0 : i32
    %c0_i32_0 = arith.constant 0 : i32
    %c0_i32_1 = arith.constant 0 : i32
    return %arg0, %c0_i32, %c0_i32_0 : i32, i32, i32
  }
}

</mosaic_0001>

<llo_original>
// kernel: tpu_custom_call.1
$region0: #{tpu_custom_call.1}
  #allocation0 [shape = 'u32[]', space=smem, size = 0x4, offset = 0x4, fixed_abs, tag = 'smem constant byte address 0x4 - core index']
  #allocation1 [shape = 'u32[144,128]{1,0:T(1,128)}', space=vmem, size = 0x12000, scoped, tag = 'internal scratch']
  %s0 = inlined_call_operand.hbm [shape: f32[16,128], index: 0, kind: input, shape index: {}]
  %s1 = inlined_call_operand.hbm [shape: f32[16,128], index: 1, kind: input, shape index: {}]
  %s2 = inlined_call_operand.hbm [shape: f32[1,1,128], index: 2, kind: output, shape index: {}]
  %s3 = sld [smem:[#allocation0]]
  $region30: #{tpu_custom_call.1} parent=0
    _
  %s5 = ssub.s32 1, %s3
  %s6 = scalar_select 0, %s5, %s3
  $region1: #{tpu_custom_call.1} parent=0
    #allocation2 [shape = 'u8[8192]{0}', space=vmem, size = 0x2000, scoped, tag = 'input window, operand 0, single buffered']
    #allocation3 [shape = 's32[1]{0}', space=sflag, size = 0x4, scoped, tag = 'scoped memory for tpu_custom_call.1']
    #allocation4 [shape = 's32[1]{0}', space=sflag, size = 0x4, scoped, tag = 'scoped memory for tpu_custom_call.1']
    #allocation5 [shape = 'u8[8192]{0}', space=vmem, size = 0x2000, scoped, tag = 'input window, operand 1, single buffered']
    #allocation6 [shape = 's32[1]{0}', space=sflag, size = 0x4, scoped, tag = 'scoped memory for tpu_custom_call.1']
    #allocation7 [shape = 'u8[512]{0}', space=vmem, size = 0x400, scoped, tag = 'output window, operand 0, single buffered']
    %7 = vsyncpa [#allocation3], 0
    %8 = vsyncpa [#allocation6], 0
    %9 = vsyncpa [#allocation4], 0
    // Predicated region
    $region2: #{tpu_custom_call.1} parent=1 // pred_check
      _
    $region3: #{tpu_custom_call.1} parent=1 // pred_check_branch
      %11 = sbr.rel (0) target = $region5
    $region4: #{tpu_custom_call.1} parent=1 // pred_region
      %s12 = sadd.s32 0, 0
      %s13 = smul.u32 2, %s12
      %s15 = ssub.s32 256, 256
      %16 = vsyncadd [#allocation3], %s15
      %s17 = smul.addr %s13, 128
      %s18 = scalar_lea.hbm %s0, %s17
      %s19 = sshll.u32 [#allocation2], 4
      %s20 = int_to_ptr.vmem [resolvable:$true] %s19
      %25 = dma.hbm_to_vmem [thread:$0]  %s18, 256, %s20, [#allocation3], 128, 128, 8
    $region5: #{tpu_custom_call.1} parent=1 // pred_fallthru
      _
    // Predicated region
    $region6: #{tpu_custom_call.1} parent=1 // pred_check
      _
    $region7: #{tpu_custom_call.1} parent=1 // pred_check_branch
      %27 = sbr.rel (0) target = $region9
    $region8: #{tpu_custom_call.1} parent=1 // pred_region
      %s28 = sadd.s32 0, 0
      %s29 = smul.u32 2, %s28
      %s31 = ssub.s32 256, 256
      %32 = vsyncadd [#allocation6], %s31
      %s33 = smul.addr %s29, 128
      %s34 = scalar_lea.hbm %s1, %s33
      %s35 = sshll.u32 [#allocation5], 4
      %s36 = int_to_ptr.vmem [resolvable:$true] %s35
      %41 = dma.hbm_to_vmem [thread:$0]  %s34, 256, %s36, [#allocation6], 128, 128, 8
    $region9: #{tpu_custom_call.1} parent=1 // pred_fallthru
      _
    // Predicated region
    $region10: #{tpu_custom_call.1} parent=1 // pred_check
      _
    $region11: #{tpu_custom_call.1} parent=1 // pred_check_branch
      %43 = sbr.rel (0) target = $region13
    $region12: #{tpu_custom_call.1} parent=1 // pred_region
      %44 = dma.done [#allocation3], 256
    $region13: #{tpu_custom_call.1} parent=1 // pred_fallthru
      _
    // Predicated region
    $region14: #{tpu_custom_call.1} parent=1 // pred_check
      _
    $region15: #{tpu_custom_call.1} parent=1 // pred_check_branch
      %46 = sbr.rel (0) target = $region17
    $region16: #{tpu_custom_call.1} parent=1 // pred_region
      %47 = dma.done [#allocation6], 256
    $region17: #{tpu_custom_call.1} parent=1 // pred_fallthru
      _
    %s48 = sadd.s32 0, 0
    %s49 = smul.u32 2, %s48
    %s50 = sadd.s32 0, 0
    %s51 = smul.u32 2, %s50
    %p52 = scmp.eq.s32.totalorder 0, 0
    // Predicated region
    $region18: #{tpu_custom_call.1} parent=1 // pred_check
      %p53 = pneg %p52
    $region19: #{tpu_custom_call.1} parent=1 // pred_check_branch
      %55 = sbr.rel (%p53) target = $region21
    $region20: #{tpu_custom_call.1} parent=1 // pred_region
      %56 = vst [vmem:[#allocation7] sm:$0x1] 0.0
    $region21: #{tpu_custom_call.1} parent=1 // pred_fallthru
      _
    %v57 = vld [vmem:[#allocation2] sm:$0xff]
    %v58 = vld [vmem:[#allocation2 + $0x8] sm:$0xff]
    %v59 = vld [vmem:[#allocation5] sm:$0xff]
    %v60 = vld [vmem:[#allocation5 + $0x8] sm:$0xff]
    %v61 = vsub.f32 %v57, %v59
    %v62 = vsub.f32 %v58, %v60
    %v63 = vld [vmem:[#allocation7] sm:$0x1]
    %v64 = vmul.f32 %v61, %v61
    %v65 = vmul.f32 %v62, %v62
    %v66 = vadd.f32 %v64, %v65
    %v67 = vrot.slane %v66, 4
    %v68 = vadd.f32 %v66, %v67
    %v69 = vrot.slane %v68, 2
    %v70 = vadd.f32 %v68, %v69
    %v71 = vrot.slane %v70, 1
    %v72 = vadd.f32 %v70, %v71
    %v73 = vadd.f32 %v63, %v72
    %74 = vst [vmem:[#allocation7] sm:$0x1] %v73
    // Predicated region
    $region22: #{tpu_custom_call.1} parent=1 // pred_check
      _
    $region23: #{tpu_custom_call.1} parent=1 // pred_check_branch
      %76 = sbr.rel (0) target = $region25
    $region24: #{tpu_custom_call.1} parent=1 // pred_region
      %s78 = ssub.s32 16, 16
      %79 = vsyncadd [#allocation4], %s78
      %s81 = sshll.u32 [#allocation7], 4
      %s82 = int_to_ptr.vmem [resolvable:$true] %s81
      %84 = dma.vmem_to_hbm [thread:$0]  %s82, 16, %s2, [#allocation4]
    $region25: #{tpu_custom_call.1} parent=1 // pred_fallthru
      _
    // Predicated region
    $region26: #{tpu_custom_call.1} parent=1 // pred_check
      _
    $region27: #{tpu_custom_call.1} parent=1 // pred_check_branch
      %86 = sbr.rel (0) target = $region29
    $region28: #{tpu_custom_call.1} parent=1 // pred_region
      %87 = dma.done [#allocation4], 16
    $region29: #{tpu_custom_call.1} parent=1 // pred_fallthru
      _
    %88 = vsyncpa [#allocation3], 1
    %89 = vsyncpa [#allocation6], 1
    %90 = vsyncpa [#allocation4], 1

</llo_original>
